<compile_context>
chip_gen: v5e
topology: v5e:2x2
jax: 0.10.0
libtpu: 0.0.40
codegen_flags: <defaults>
</compile_context>

<pallas_src>
import jax
import jax.numpy as jnp
from jax import lax
from jax.experimental import pallas as pl
from jax.experimental.pallas import tpu as pltpu


def linear_softmax_kernel(x_ref, w_ref, o_ref):
    # x_ref: (N, K) f32 in VMEM, w_ref: (4, K) f32 in VMEM, o_ref: (4, N) f32.
    x = x_ref[...]
    w = w_ref[...]
    # y[c, n] = sum_k w[c, k] * x[n, k]  ->  (4, N); this is (x @ W^T)^T with
    # the batch axis on lanes.  No transpose is materialized; the MXU is fed
    # directly by contracting K on both operands.
    y = lax.dot_general(
        w, x,
        dimension_numbers=(((1,), (1,)), ((), ())),
        preferred_element_type=jnp.float32,
    )
    # Numerically stable softmax over the batch axis (dim=0 of the reference
    # (N, 4) output == last axis here), all in f32.  Exact normalization so
    # each softmax "column" sums to 1 within f32 epsilon.
    m = jnp.max(y, axis=-1, keepdims=True)
    e = jnp.exp(y - m)
    s = jnp.sum(e, axis=-1, keepdims=True)
    o_ref[...] = (e / s).astype(o_ref.dtype)


def neural_network_forward(x, w):
    """x: (N, 300) float32, w: (4, 300) float32 -> (N, 4) float32."""
    n, _ = x.shape
    d_out = w.shape[0]
    # Gridless single-block call: whole arrays live in VMEM, no pipeline.
    # Kernel emits the lane-dense (4, N) result; transpose in the wrapper only
    # because the module's contract is an (N, 4) output.
    out_t = pl.pallas_call(
        linear_softmax_kernel,
        out_shape=jax.ShapeDtypeStruct((d_out, n), jnp.float32),
        in_specs=[
            pl.BlockSpec(memory_space=pltpu.MemorySpace.VMEM),
            pl.BlockSpec(memory_space=pltpu.MemorySpace.VMEM),
        ],
        out_specs=pl.BlockSpec(memory_space=pltpu.MemorySpace.VMEM),
    )(x, w)
    return out_t.T


def reference_forward(x, w):
    y = x @ w.T
    y = y - jnp.max(y, axis=0, keepdims=True)
    e = jnp.exp(y)
    return e / jnp.sum(e, axis=0, keepdims=True)


if __name__ == "__main__":
    key = jax.random.PRNGKey(0)
    kx, kw = jax.random.split(key)

    N, D_IN, D_OUT = 8, 300, 4

    x = jax.random.normal(kx, (N, D_IN), dtype=jnp.float32)
    # Deterministic weight init (PyTorch-style uniform(-1/sqrt(fan_in), +1/sqrt(fan_in)))
    bound = 1.0 / jnp.sqrt(jnp.float32(D_IN))
    w = jax.random.uniform(kw, (D_OUT, D_IN), dtype=jnp.float32,
                           minval=-bound, maxval=bound)

    out = neural_network_forward(x, w)
    out = jax.block_until_ready(out)

    ref = reference_forward(x, w)
    assert out.shape == (N, D_OUT)
    assert jnp.allclose(out, ref, atol=1e-5, rtol=1e-5), "mismatch vs reference"
    # softmax over dim=0: each column sums to ~1 (exact normalization now)
    assert jnp.allclose(jnp.sum(out, axis=0), jnp.ones((D_OUT,)), atol=1e-5)

    print("KERNEL_OK")
</pallas_src>

<mosaic_0001>
module attributes {stable_mosaic.version = 11 : i64} {
  func.func @linear_softmax_kernel(%arg0: memref<8x300xf32, #tpu.memory_space<vmem>>, %arg1: memref<4x300xf32, #tpu.memory_space<vmem>>, %arg2: memref<4x8xf32, #tpu.memory_space<vmem>>) attributes {dimension_semantics = [], scalar_prefetch = 0 : i64, scratch_operands = 0 : i64, tpu.core_type = #tpu.core_type<tc>} {
    %c0 = arith.constant 0 : index
    %c0_0 = arith.constant 0 : index
    %0 = vector.load %arg0[%c0, %c0_0] : memref<8x300xf32, #tpu.memory_space<vmem>>, vector<8x300xf32>
    %c0_1 = arith.constant 0 : index
    %c0_2 = arith.constant 0 : index
    %1 = vector.load %arg1[%c0_1, %c0_2] : memref<4x300xf32, #tpu.memory_space<vmem>>, vector<4x300xf32>
    %cst = arith.constant dense<0.000000e+00> : vector<4x8xf32>
    %2 = tpu.matmul %1, %0, %cst {dimension_numbers = #tpu.dot_dimension_numbers<[1], [1], [0], [0], [0, 0, 1, 0], [], []>} : vector<4x300xf32>, vector<8x300xf32>, vector<4x8xf32> -> vector<4x8xf32>
    %cst_3 = arith.constant dense<0xFF800000> : vector<4xf32>
    %3 = vector.multi_reduction <maximumf>, %2, %cst_3 [1] : vector<4x8xf32> to vector<4xf32>
    %4 = vector.shape_cast %3 : vector<4xf32> to vector<4x1xf32>
    %5 = vector.broadcast %4 : vector<4x1xf32> to vector<4x8xf32>
    %6 = arith.subf %2, %5 : vector<4x8xf32>
    %7 = math.exp %6 : vector<4x8xf32>
    %cst_4 = arith.constant dense<0.000000e+00> : vector<4xf32>
    %8 = vector.multi_reduction <add>, %7, %cst_4 [1] : vector<4x8xf32> to vector<4xf32>
    %9 = vector.shape_cast %8 : vector<4xf32> to vector<4x1xf32>
    %10 = vector.broadcast %9 : vector<4x1xf32> to vector<4x8xf32>
    %11 = arith.divf %7, %10 : vector<4x8xf32>
    %c0_5 = arith.constant 0 : index
    %c0_6 = arith.constant 0 : index
    %12 = vector.load %arg2[%c0_5, %c0_6] : memref<4x8xf32, #tpu.memory_space<vmem>>, vector<4x8xf32>
    tpu.vector_store %arg2[%c0_5, %c0_6], %11 {strides = array<i32>} : memref<4x8xf32, #tpu.memory_space<vmem>>, vector<4x8xf32>,
    return
  }
}

</mosaic_0001>

<llo_original>
// kernel: tpu_custom_call.1
$region0: #{tpu_custom_call.1}
  #allocation0 [shape = 'u32[]', space=smem, size = 0x4, offset = 0x4, fixed_abs, tag = 'smem constant byte address 0x4 - core index']
  #allocation1 [shape = 'u32[72,128]{1,0:T(1,128)}', space=vmem, size = 0x9000, scoped, tag = 'internal scratch']
  %s0 = inlined_call_operand.hbm [shape: f32[8,300], index: 0, kind: input, shape index: {}]
  %s1 = inlined_call_operand.hbm [shape: f32[4,300], index: 1, kind: input, shape index: {}]
  %s2 = inlined_call_operand.hbm [shape: f32[4,8], index: 2, kind: output, shape index: {}]
  %s3 = sld [smem:[#allocation0]]
  $region26: #{tpu_custom_call.1} parent=0
    _
  %s5 = ssub.s32 1, %s3
  %s6 = scalar_select 0, %s5, %s3
  $region1: #{tpu_custom_call.1} parent=0
    #allocation2 [shape = 'u8[12288]{0}', space=vmem, size = 0x3000, scoped, tag = 'input window, operand 0, single buffered']
    #allocation3 [shape = 's32[1]{0}', space=sflag, size = 0x4, scoped, tag = 'scoped memory for tpu_custom_call.1']
    #allocation4 [shape = 's32[1]{0}', space=sflag, size = 0x4, scoped, tag = 'scoped memory for tpu_custom_call.1']
    #allocation5 [shape = 'u8[6144]{0}', space=vmem, size = 0x1800, scoped, tag = 'input window, operand 1, single buffered']
    #allocation6 [shape = 's32[1]{0}', space=sflag, size = 0x4, scoped, tag = 'scoped memory for tpu_custom_call.1']
    #allocation7 [shape = 'u8[2048]{0}', space=vmem, size = 0x800, scoped, tag = 'output window, operand 0, single buffered']
    %7 = vsyncpa [#allocation3], 0
    %8 = vsyncpa [#allocation6], 0
    %9 = vsyncpa [#allocation4], 0
    // Predicated region
    $region2: #{tpu_custom_call.1} parent=1 // pred_check
      _
    $region3: #{tpu_custom_call.1} parent=1 // pred_check_branch
      %11 = sbr.rel (0) target = $region5
    $region4: #{tpu_custom_call.1} parent=1 // pred_region
      %13 = vsyncadd [#allocation3], 0
      %s15 = sshll.u32 %s0, 4
      %s16 = int_to_ptr.hbm [resolvable:$true] %s15
      %s17 = sshll.u32 [#allocation2], 4
      %s18 = int_to_ptr.vmem [resolvable:$true] %s17
      %20 = dma.hbm_to_vmem [thread:$0]  %s16, 384, %s18, [#allocation3]
    $region5: #{tpu_custom_call.1} parent=1 // pred_fallthru
      _
    // Predicated region
    $region6: #{tpu_custom_call.1} parent=1 // pred_check
      _
    $region7: #{tpu_custom_call.1} parent=1 // pred_check_branch
      %22 = sbr.rel (0) target = $region9
    $region8: #{tpu_custom_call.1} parent=1 // pred_region
      %24 = vsyncadd [#allocation6], 0
      %s26 = sshll.u32 %s1, 4
      %s27 = int_to_ptr.hbm [resolvable:$true] %s26
      %s28 = sshll.u32 [#allocation5], 4
      %s29 = int_to_ptr.vmem [resolvable:$true] %s28
      %31 = dma.hbm_to_vmem [thread:$0]  %s27, 192, %s29, [#allocation6]
    $region9: #{tpu_custom_call.1} parent=1 // pred_fallthru
      _
    // Predicated region
    $region10: #{tpu_custom_call.1} parent=1 // pred_check
      _
    $region11: #{tpu_custom_call.1} parent=1 // pred_check_branch
      %33 = sbr.rel (0) target = $region13
    $region12: #{tpu_custom_call.1} parent=1 // pred_region
      %35 = dma.done [#allocation3], 384
    $region13: #{tpu_custom_call.1} parent=1 // pred_fallthru
      _
    // Predicated region
    $region14: #{tpu_custom_call.1} parent=1 // pred_check
      _
    $region15: #{tpu_custom_call.1} parent=1 // pred_check_branch
      %37 = sbr.rel (0) target = $region17
    $region16: #{tpu_custom_call.1} parent=1 // pred_region
      %39 = dma.done [#allocation6], 192
    $region17: #{tpu_custom_call.1} parent=1 // pred_fallthru
      _
    %v40 = vld [vmem:[#allocation2] sm:$0xff]
    %v41 = vld [vmem:[#allocation2 + $0x8] sm:$0xff]
    %v42 = vld [vmem:[#allocation2 + $0x10] sm:$0xff]
    %v43 = vld [vmem:[#allocation5] sm:$0xff]
    %v44 = vld [vmem:[#allocation5 + $0x8] sm:$0xf]
    %47 = vst [vmem:[#allocation1] ss:$2 sm:$0xff] %v43
    %s48 = scalar_lea.vmem [#allocation1], 16
    %49 = vst [vmem:[%s48] ss:$2 sm:$0xff] %v44
    %v50 = vld.sshfl [vmem:[#allocation1] sm:$0xff pattern:$0x75316420]
    %v51 = vld.sshfl [vmem:[#allocation1 + $0x8] sm:$0xff pattern:$0x75316420]
    %v52 = vld.sshfl [vmem:[#allocation1 + $0x10] sm:$0xff pattern:$0x75316420]
    %vm55 = vcmask 359424
    %v56 = vsel %vm55, %v52, 0
    %v59 = vsel %vm55, %v42, 0
    %61 = vmatpush.xpose.msra.mxu0 0.0
    %62 = vmatpush.xpose.msra.mxu0 0.0
    %63 = vmatpush.xpose.msra.mxu0 0.0
    %64 = vmatpush.xpose.msra.mxu0 0.0
    %65 = vmatpush.xpose.msra.mxu0 0.0
    %66 = vmatpush.xpose.msra.mxu0 0.0
    %67 = vmatpush.xpose.msra.mxu0 0.0
    %68 = vmatpush.xpose.msra.mxu0 0.0
    %69 = vmatpush.xpose.msra.mxu0 0.0
    %70 = vmatpush.xpose.msra.mxu0 0.0
    %71 = vmatpush.xpose.msra.mxu0 0.0
    %72 = vmatpush.xpose.msra.mxu0 0.0
    %73 = vmatpush.xpose.msra.mxu0 0.0
    %74 = vmatpush.xpose.msra.mxu0 0.0
    %75 = vmatpush.xpose.msra.mxu0 0.0
    %76 = vmatpush.xpose.msra.mxu0 %v40
    %77 = vmatmul.f32.gmra.mxu0 %v50
    %v78 = vpop.f32.mrf.mxu0
    %v79 = vadd.f32 0.0, %v78
    %80 = vdwg.mxu0
    %81 = vmatpush.xpose.msra.mxu0 0.0
    %82 = vmatpush.xpose.msra.mxu0 0.0
    %83 = vmatpush.xpose.msra.mxu0 0.0
    %84 = vmatpush.xpose.msra.mxu0 0.0
    %85 = vmatpush.xpose.msra.mxu0 0.0
    %86 = vmatpush.xpose.msra.mxu0 0.0
    %87 = vmatpush.xpose.msra.mxu0 0.0
    %88 = vmatpush.xpose.msra.mxu0 0.0
    %89 = vmatpush.xpose.msra.mxu0 0.0
    %90 = vmatpush.xpose.msra.mxu0 0.0
    %91 = vmatpush.xpose.msra.mxu0 0.0
    %92 = vmatpush.xpose.msra.mxu0 0.0
    %93 = vmatpush.xpose.msra.mxu0 0.0
    %94 = vmatpush.xpose.msra.mxu0 0.0
    %95 = vmatpush.xpose.msra.mxu0 0.0
    %96 = vmatpush.xpose.msra.mxu0 %v41
    %97 = vmatmul.f32.gmra.mxu0 %v51
    %v98 = vpop.f32.mrf.mxu0
    %v99 = vadd.f32 %v79, %v98
    %100 = vdwg.mxu0
    %101 = vmatpush.xpose.msra.mxu0 0.0
    %102 = vmatpush.xpose.msra.mxu0 0.0
    %103 = vmatpush.xpose.msra.mxu0 0.0
    %104 = vmatpush.xpose.msra.mxu0 0.0
    %105 = vmatpush.xpose.msra.mxu0 0.0
    %106 = vmatpush.xpose.msra.mxu0 0.0
    %107 = vmatpush.xpose.msra.mxu0 0.0
    %108 = vmatpush.xpose.msra.mxu0 0.0
    %109 = vmatpush.xpose.msra.mxu0 0.0
    %110 = vmatpush.xpose.msra.mxu0 0.0
    %111 = vmatpush.xpose.msra.mxu0 0.0
    %112 = vmatpush.xpose.msra.mxu0 0.0
    %113 = vmatpush.xpose.msra.mxu0 0.0
    %114 = vmatpush.xpose.msra.mxu0 0.0
    %115 = vmatpush.xpose.msra.mxu0 0.0
    %116 = vmatpush.xpose.msra.mxu0 %v59
    %117 = vmatmul.f32.gmra.mxu0 %v56
    %v118 = vpop.f32.mrf.mxu0
    %v119 = vadd.f32 %v99, %v118
    %120 = vdwg.mxu0
    %vm121 = vcmask 60416
    %v122 = vsel %vm121, %v119, -inf
    %123 = vmax.xlane.f32.xlu0 %v122
    %v124 = vpop.xlane.xlu0 %123
    %v125 = vsub.f32 %v119, %v124
    %v126 = vmul.f32 %v125, 1.442695
    %v127 = vpow.pop %v126
    %v128 = vsel %vm121, %v127, 0.0
    %129 = vadd.xlane.f32.xlu0 %v128
    %v130 = vpop.xlane.xlu0 %129
    %v131 = vrcp.pop %v130
    %v132 = vmul.f32 %v130, %v131
    %v133 = vsub.f32 1.0, %v132
    %v134 = vmul.f32 %v131, %v133
    %v135 = vadd.f32 %v131, %v134
    %vm136 = vweird.f32 %v130
    %vm137 = vweird.f32 %v131
    %vm138 = vmor %vm136, %vm137
    %v139 = vsel %vm138, %v131, %v135
    %v140 = vand.u32 2147483647, %v130
    %vm141 = vcmp.eq.f32.partialorder %v140, 8.507059e+37
    %v142 = vand.u32 %v130, 2147483648
    %v143 = vor.u32 1.1754944e-38, %v142
    %v144 = vsel %vm141, %v143, %v139
    %v145 = vmul.f32 %v127, %v144
    %146 = vst.msk [vmem:[#allocation7] sm:$0xf] %vm121, %v145
    // Predicated region
    $region18: #{tpu_custom_call.1} parent=1 // pred_check
      _
    $region19: #{tpu_custom_call.1} parent=1 // pred_check_branch
      %148 = sbr.rel (0) target = $region21
    $region20: #{tpu_custom_call.1} parent=1 // pred_region
      %150 = vsyncadd [#allocation4], 0
      %s152 = sshll.u32 [#allocation7], 4
      %s153 = int_to_ptr.vmem [resolvable:$true] %s152
      %s154 = sshll.u32 %s2, 4
      %s155 = int_to_ptr.hbm [resolvable:$true] %s154
      %157 = dma.vmem_to_hbm [thread:$0]  %s153, 64, %s155, [#allocation4]
    $region21: #{tpu_custom_call.1} parent=1 // pred_fallthru
      _
    // Predicated region
    $region22: #{tpu_custom_call.1} parent=1 // pred_check
      _
    $region23: #{tpu_custom_call.1} parent=1 // pred_check_branch
      %159 = sbr.rel (0) target = $region25
    $region24: #{tpu_custom_call.1} parent=1 // pred_region
      %161 = dma.done [#allocation4], 64
    $region25: #{tpu_custom_call.1} parent=1 // pred_fallthru
      _
    %162 = vsyncpa [#allocation3], 1
    %163 = vsyncpa [#allocation6], 1
    %164 = vsyncpa [#allocation4], 1

</llo_original>
